<compile_context>
chip_gen: v5e
topology: v5e:2x2
jax: 0.10.0
libtpu: 0.0.40
codegen_flags: <defaults>
</compile_context>

<pallas_src>
import numpy as np
import jax
import jax.numpy as jnp
from jax.experimental import pallas as pl
from jax.experimental.pallas import tpu as pltpu


# --------------------------- VMEM budget (per chip) --------------------------

def _vmem_limit_bytes():
    """Generation-aware scoped-VMEM limit (~0.8x physical: ~51 MiB v7x, ~102 MiB v5e/v6e)."""
    try:
        cap = int(getattr(pltpu.get_tpu_info(), "vmem_capacity_bytes"))
        cap = max(32 * 1024 * 1024, min(cap, 128 * 1024 * 1024))
    except Exception:
        cap = 64 * 1024 * 1024
    return int(cap * 0.8)


# ------------------------------- Pallas kernels ------------------------------

def _spectral_kernel(xs_ref, xh_ref, ah_ref, aw_ref, o_ref):
    """One (o-tile, batch) step of the factorized spectral conv.

    xs_ref: (1, C*H, W)  bf16  x[b] in native NCHW, stacked (C*H, W)  -> H-branch RHS (K = C*H)
    xh_ref: (1, H, C*W)  bf16  x[b] in NHCW layout,  stacked (H, C*W) -> W-branch LHS (K = C*W)
    ah_ref: (OT*H, C*H)  bf16  left-DFT blocks, M-stacked over the o-tile, K-stacked over c
    aw_ref: (OT, C*W, W) bf16  right-DFT blocks, K-stacked over c, one slab per out channel
    o_ref : (1, OT*H, W) f32   s[b, o-tile] in native NCHW stacked layout
    """
    OT = aw_ref.shape[0]
    H = xh_ref.shape[1]
    xs = xs_ref[0]                                                        # (C*H, W) bf16
    xh = xh_ref[0]                                                        # (H, C*W) bf16
    # H-branch: single MXU matmul, input channels folded into K and the o-tile into M.
    sh = jnp.dot(ah_ref[...], xs, preferred_element_type=jnp.float32)     # (OT*H, W) f32
    # W-branch: one K-stacked matmul per out channel of the tile (OT is small and static).
    for o in range(OT):
        sw = jnp.dot(xh, aw_ref[o], preferred_element_type=jnp.float32)   # (H, W) f32
        o_ref[0, o * H:(o + 1) * H, :] = sh[o * H:(o + 1) * H, :] + sw


def spectral_conv(x_stack, x_hcw, ah_big, aw_stk, *, o_tile):
    """Factorized spectral conv (both branches summed); output (B, C*H, W) f32 (NCHW-stacked)."""
    B, CH, W = x_stack.shape
    H = x_hcw.shape[1]
    C = CH // H
    n_ot = C // o_tile
    flops = 2 * B * C * C * H * W * (H + W)
    # Weights streamed once per o-tile pass (resident across the inner batch axis),
    # x (both bf16 views) re-read once per o-tile, output written once.
    bytes_acc = (n_ot * B * 2 * C * H * W * 2
                 + C * C * (H * H + W * W) * 2
                 + B * C * H * W * 4)
    return pl.pallas_call(
        _spectral_kernel,
        out_shape=jax.ShapeDtypeStruct((B, CH, W), jnp.float32),
        grid_spec=pltpu.PrefetchScalarGridSpec(
            num_scalar_prefetch=0,
            # o-tile is the OUTER axis, batch the INNER one: DFT blocks (indexed only by
            # `ot`) are fetched once per pass and stay resident while x streams over b.
            grid=(n_ot, B),
            in_specs=[
                pl.BlockSpec((1, CH, W), lambda ot, b: (b, 0, 0)),
                pl.BlockSpec((1, H, C * W), lambda ot, b: (b, 0, 0)),
                pl.BlockSpec((o_tile * H, CH), lambda ot, b: (ot, 0)),
                pl.BlockSpec((o_tile, C * W, W), lambda ot, b: (ot, 0, 0)),
            ],
            out_specs=pl.BlockSpec((1, o_tile * H, W), lambda ot, b: (b, ot, 0)),
        ),
        compiler_params=pltpu.CompilerParams(
            dimension_semantics=("parallel", "parallel"),
            vmem_limit_bytes=_vmem_limit_bytes(),
        ),
        cost_estimate=pl.CostEstimate(
            flops=int(flops), transcendentals=0, bytes_accessed=int(bytes_acc)),
    )(x_stack, x_hcw, ah_big, aw_stk)


def _ff_kernel(s_ref, x_ref, w1t_ref, b1_ref, g_ref, bt_ref, w2t_ref, b2_ref, o_ref):
    """Fused Linear(C->2C) -> ReLU -> LayerNorm -> Linear(2C->C) + residual.

    Channel-major, lane-dense blocks: tokens on the lane (last) dim.
    s_ref/x_ref/o_ref: (1, C, T) f32; FF weights bf16 (single-pass MXU, f32 accumulation).
    """
    s = s_ref[0].astype(jnp.bfloat16)                                      # (C, T)
    z = jnp.dot(w1t_ref[...], s, preferred_element_type=jnp.float32)       # (2C, T)
    z = jnp.maximum(z + b1_ref[...], 0.0)
    mu = jnp.mean(z, axis=0, keepdims=True)
    zc = z - mu
    var = jnp.mean(zc * zc, axis=0, keepdims=True)
    zn = zc * jax.lax.rsqrt(var + 1e-5) * g_ref[...] + bt_ref[...]
    out = jnp.dot(w2t_ref[...], zn.astype(jnp.bfloat16),
                  preferred_element_type=jnp.float32) + b2_ref[...]        # (C, T)
    o_ref[0] = (out + x_ref[0]).astype(o_ref.dtype)                        # f32 residual


def ff_residual(s, x, w1t, b1, gamma, beta, w2t, b2, *, t_tile):
    B, C, HW = s.shape
    Ch = w1t.shape[0]
    n_t = HW // t_tile
    flops = 4 * B * HW * C * Ch + 12 * B * HW * Ch
    bytes_acc = 3 * B * C * HW * 4 + 2 * C * Ch * 2 + 4 * Ch * 4 + 2 * C * 4
    tok = lambda b, t: (b, 0, t)
    full = lambda b, t: (0, 0)
    return pl.pallas_call(
        _ff_kernel,
        out_shape=jax.ShapeDtypeStruct((B, C, HW), jnp.float32),
        grid_spec=pltpu.PrefetchScalarGridSpec(
            num_scalar_prefetch=0,
            grid=(B, n_t),                       # batch x token-tiles (multiples of 128 lanes)
            in_specs=[
                pl.BlockSpec((1, C, t_tile), tok),   # spectral-conv output (branch sum)
                pl.BlockSpec((1, C, t_tile), tok),   # residual x (f32, native layout)
                pl.BlockSpec((Ch, C), full),         # w1^T  (bf16)
                pl.BlockSpec((Ch, 1), full),         # b1
                pl.BlockSpec((Ch, 1), full),         # ln gamma
                pl.BlockSpec((Ch, 1), full),         # ln beta
                pl.BlockSpec((C, Ch), full),         # w2^T  (bf16)
                pl.BlockSpec((C, 1), full),          # b2
            ],
            out_specs=pl.BlockSpec((1, C, t_tile), tok),
        ),
        compiler_params=pltpu.CompilerParams(
            dimension_semantics=("parallel", "parallel"),
            vmem_limit_bytes=_vmem_limit_bytes(),
        ),
        cost_estimate=pl.CostEstimate(
            flops=int(flops), transcendentals=int(B * HW),
            bytes_accessed=int(bytes_acc)),
    )(s, x, w1t, b1, gamma, beta, w2t, b2)


# ------------------------ parameter setup (glue, host) -----------------------

def build_spectral_blocks(w_re, w_im, size, n_modes):
    """Fold (rfft -> keep n_modes -> complex channel mix -> irfft, ortho norm) into exact
    per-(in,out)-channel real (size, size) blocks.  w_re/w_im: (I, O, n_modes).

    Returns (right, left):
      right[i, o]: (size, size) used as  x(H,W) @ right[i,o]  (mix last dim)
      left [i, o]: (size, size) used as  left[i,o] @ x(H,W)   (mix first dim)
    """
    k = np.arange(n_modes)
    pos = np.arange(size)
    theta = 2.0 * np.pi * np.outer(k, pos) / size          # (K, size)
    Ef = np.exp(-1j * theta)                               # forward DFT rows [k, src]
    Eb = np.exp(+1j * theta)                               # inverse DFT rows [k, dst]
    c = np.where(k == 0, 1.0, 2.0).astype(np.float64)      # hermitian doubling
    if size % 2 == 0 and n_modes == size // 2 + 1:
        c[-1] = 1.0                                        # Nyquist counted once
    wc = (w_re.astype(np.complex128) + 1j * w_im.astype(np.complex128)) * c[None, None, :]
    M = np.einsum("iok,ks,kd->isod", wc, Ef, Eb).real / size   # (I, src, O, dst)
    right = np.transpose(M, (0, 2, 1, 3))                  # (I, O, src, dst)
    left = np.transpose(M, (0, 2, 3, 1))                   # (I, O, dst, src)
    return right, left


def build_stacked_weights(ah_blk, aw_blk):
    """Host pre-layout for the K/M-stacked kernel.

    ah_blk (C, O, H, H) -> Ah_big (O*H, C*H):    S_h = Ah_big @ x_(C*H, W)
    aw_blk (C, O, W, W) -> Aw_stk (O, C*W, W):   S_w[o] = x_(H, C*W) @ Aw_stk[o]
    """
    C, O, H, _ = ah_blk.shape
    W = aw_blk.shape[-1]
    ah_big = np.transpose(ah_blk, (1, 2, 0, 3)).reshape(O * H, C * H)
    aw_stk = np.transpose(aw_blk, (1, 0, 2, 3)).reshape(O, C * W, W)
    return ah_big, aw_stk


def init_params(key, C, H, W, n_modes):
    kh, kw = n_modes
    keys = jax.random.split(key, 6)
    scale = 1.0 / (C * C)
    fw_w = jax.random.normal(keys[0], (C, C, kw, 2), dtype=jnp.float32) * scale
    fw_h = jax.random.normal(keys[1], (C, C, kh, 2), dtype=jnp.float32) * scale
    fw_w_np = np.asarray(fw_w)
    fw_h_np = np.asarray(fw_h)
    aw_blk, _ = build_spectral_blocks(fw_w_np[..., 0], fw_w_np[..., 1], W, kw)   # (C,C,W,W) right
    _, ah_blk = build_spectral_blocks(fw_h_np[..., 0], fw_h_np[..., 1], H, kh)   # (C,C,H,H) left
    ah_big, aw_stk = build_stacked_weights(ah_blk, aw_blk)

    Ch = 2 * C
    return {
        "fw_w": fw_w,                                          # raw spectral weights (reference)
        "fw_h": fw_h,
        "ah_big": jnp.asarray(ah_big, dtype=jnp.bfloat16),     # (C*H, C*H)
        "aw_stk": jnp.asarray(aw_stk, dtype=jnp.bfloat16),     # (C, C*W, W)
        "w1": jax.random.normal(keys[2], (C, Ch), dtype=jnp.float32) / np.sqrt(C),
        "b1": jax.random.normal(keys[3], (1, Ch), dtype=jnp.float32) * 0.1,
        "gamma": jnp.ones((1, Ch), dtype=jnp.float32),
        "beta": jnp.zeros((1, Ch), dtype=jnp.float32),
        "w2": jax.random.normal(keys[4], (Ch, C), dtype=jnp.float32) / np.sqrt(Ch),
        "b2": jax.random.normal(keys[5], (1, C), dtype=jnp.float32) * 0.1,
    }


# ---------------------------------- forward ----------------------------------

def factor_fno2d_block(x, params, *, o_tile=2, t_tile=128):
    """x: (B, C, H, W) float32 -> (B, C, H, W) float32.

    o_tile: out channels per spectral grid step; size so o_tile*H ~ 128 (v5e) / 256 (v6e, v7x).
    t_tile: FF token tile (multiple of 128 lanes) bounding VMEM per step.
    """
    B, C, H, W = x.shape
    HW = H * W
    if C % o_tile:
        o_tile = C
    if HW % t_tile:
        t_tile = HW

    # bf16 MXU operands for the spectral conv (review item: cast once in the wrapper).
    x_bf = x.astype(jnp.bfloat16)
    x_stack = x_bf.reshape(B, C * H, W)                               # free NCHW view
    x_hcw = jnp.transpose(x_bf, (0, 2, 1, 3)).reshape(B, H, C * W)    # one NHCW copy (bf16)

    s = spectral_conv(x_stack, x_hcw, params["ah_big"], params["aw_stk"], o_tile=o_tile)

    # Fused FF + residual on channel-major, lane-dense blocks.  All reshapes below are
    # free row-major reinterpretations (no data movement).
    out = ff_residual(
        s.reshape(B, C, HW),
        x.reshape(B, C, HW),                                  # f32 residual, native layout
        jnp.transpose(params["w1"]).astype(jnp.bfloat16),     # (2C, C)
        jnp.reshape(params["b1"], (-1, 1)),                   # (2C, 1)
        jnp.reshape(params["gamma"], (-1, 1)),                # (2C, 1)
        jnp.reshape(params["beta"], (-1, 1)),                 # (2C, 1)
        jnp.transpose(params["w2"]).astype(jnp.bfloat16),     # (C, 2C)
        jnp.reshape(params["b2"], (-1, 1)),                   # (C, 1)
        t_tile=t_tile,
    )
    return out.reshape(B, C, H, W)


# ---------------------- float64 numpy references (host) ----------------------

def spectral_reference(x_np, params, n_modes):
    """Exact float64 FFT-based reference for the factorized spectral conv."""
    x64 = np.asarray(x_np, np.float64)
    B, C, H, W = x64.shape
    kh, kw = n_modes
    fw_w = np.asarray(params["fw_w"], np.float64)
    fw_h = np.asarray(params["fw_h"], np.float64)
    wc_w = fw_w[..., 0] + 1j * fw_w[..., 1]
    wc_h = fw_h[..., 0] + 1j * fw_h[..., 1]

    xft = np.fft.rfft(x64, axis=-1, norm="ortho")
    yft = np.einsum("bihk,iok->bohk", xft[..., :kw], wc_w)
    out_ft = np.zeros((B, C, H, W // 2 + 1), np.complex128)
    out_ft[..., :kw] = yft
    xx = np.fft.irfft(out_ft, n=W, axis=-1, norm="ortho")

    xft = np.fft.rfft(x64, axis=-2, norm="ortho")
    yft = np.einsum("bikw,iok->bokw", xft[:, :, :kh, :], wc_h)
    out_ft = np.zeros((B, C, H // 2 + 1, W), np.complex128)
    out_ft[:, :, :kh, :] = yft
    xy = np.fft.irfft(out_ft, n=H, axis=-2, norm="ortho")
    return xx + xy


def ff_residual_reference(s_np, x_np, params):
    """float64 Linear -> ReLU -> LayerNorm(1e-5) -> Linear + residual (NCHW in/out)."""
    s64 = np.asarray(s_np, np.float64)
    x64 = np.asarray(x_np, np.float64)
    B, C, H, W = x64.shape
    w1 = np.asarray(params["w1"], np.float64)
    b1 = np.asarray(params["b1"], np.float64)
    g = np.asarray(params["gamma"], np.float64)
    bt = np.asarray(params["beta"], np.float64)
    w2 = np.asarray(params["w2"], np.float64)
    b2 = np.asarray(params["b2"], np.float64)
    t = np.transpose(s64, (0, 2, 3, 1)).reshape(B * H * W, C)
    z = np.maximum(t @ w1 + b1, 0.0)
    mu = z.mean(-1, keepdims=True)
    var = ((z - mu) ** 2).mean(-1, keepdims=True)
    z = (z - mu) / np.sqrt(var + 1e-5) * g + bt
    o = (z @ w2 + b2).reshape(B, H, W, C).transpose(0, 3, 1, 2)
    return o + x64


# ------------------------------------ main ------------------------------------

if __name__ == "__main__":
    B, C, H, W = 2, 4, 16, 16
    n_modes = (5, 5)

    key = jax.random.PRNGKey(0)
    kx, kp = jax.random.split(key)
    x = jax.random.normal(kx, (B, C, H, W), dtype=jnp.float32)
    params = init_params(kp, C, H, W, n_modes)

    forward = jax.jit(factor_fno2d_block)
    out = jax.block_until_ready(forward(x, params))
    assert out.shape == (B, C, H, W) and out.dtype == jnp.float32

    # Standalone spectral-kernel run (identical computation) for the checks.
    x_bf = x.astype(jnp.bfloat16)
    s_kernel = jax.block_until_ready(spectral_conv(
        x_bf.reshape(B, C * H, W),
        jnp.transpose(x_bf, (0, 2, 1, 3)).reshape(B, H, C * W),
        params["ah_big"], params["aw_stk"], o_tile=2))
    s_kernel = np.asarray(s_kernel).reshape(B, C, H, W)

    x_np = np.asarray(x)
    out_np = np.asarray(out)

    # 1) Spectral kernel vs float64 FFT reference (validates the folded-DFT blocks, the
    #    K/M-stacked host layout and the Pallas kernel; tolerance covers bf16 MXU inputs).
    s_ref = spectral_reference(x_np, params, n_modes)
    np.testing.assert_allclose(s_kernel, s_ref, rtol=5e-3, atol=5e-3)

    # 2) Fused FF+residual kernel vs float64 reference applied to the kernel's own spectral
    #    output (bf16 single-pass FF matmuls -> relative-Frobenius metric, robust to rare
    #    LayerNorm-amplified tokens).
    out_ff_ref = ff_residual_reference(s_kernel, x_np, params)
    rel_ff = np.linalg.norm(out_np - out_ff_ref) / np.linalg.norm(out_ff_ref)
    assert rel_ff < 2e-2, f"FF kernel relative error {rel_ff:.3e}"

    # 3) End-to-end sanity vs the full float64 reference.
    out_ref = ff_residual_reference(s_ref, x_np, params)
    rel = np.linalg.norm(out_np - out_ref) / np.linalg.norm(out_ref)
    assert rel < 3e-2, f"end-to-end relative error {rel:.3e}"

    print("KERNEL_OK")
</pallas_src>

<mosaic_0001>
module attributes {stable_mosaic.version = 11 : i64} {
  func.func @_spectral_kernel(%arg0: i32, %arg1: i32, %arg2: memref<1x64x16xbf16, #tpu.memory_space<vmem>>, %arg3: memref<1x16x64xbf16, #tpu.memory_space<vmem>>, %arg4: memref<32x64xbf16, #tpu.memory_space<vmem>>, %arg5: memref<2x64x16xbf16, #tpu.memory_space<vmem>>, %arg6: memref<1x32x16xf32, #tpu.memory_space<vmem>>) attributes {dimension_semantics = [#tpu.dimension_semantics<parallel>, #tpu.dimension_semantics<parallel>], iteration_bounds = array<i64: 2, 2>, scalar_prefetch = 0 : i64, scratch_operands = 0 : i64, tpu.core_type = #tpu.core_type<tc>, window_params = [{transform_indices = @transform_0, window_bounds = array<i64: 1, 64, 16>}, {transform_indices = @transform_1, window_bounds = array<i64: 1, 16, 64>}, {transform_indices = @transform_2, window_bounds = array<i64: 32, 64>}, {transform_indices = @transform_3, window_bounds = array<i64: 2, 64, 16>}, {transform_indices = @transform_4, window_bounds = array<i64: 1, 32, 16>}]} {
    %c0 = arith.constant 0 : index
    %c0_0 = arith.constant 0 : index
    %c0_1 = arith.constant 0 : index
    %0 = vector.load %arg2[%c0, %c0_0, %c0_1] : memref<1x64x16xbf16, #tpu.memory_space<vmem>>, vector<1x64x16xbf16>
    %1 = vector.shape_cast %0 : vector<1x64x16xbf16> to vector<64x16xbf16>
    %c0_2 = arith.constant 0 : index
    %c0_3 = arith.constant 0 : index
    %c0_4 = arith.constant 0 : index
    %2 = vector.load %arg3[%c0_2, %c0_3, %c0_4] : memref<1x16x64xbf16, #tpu.memory_space<vmem>>, vector<1x16x64xbf16>
    %3 = vector.shape_cast %2 : vector<1x16x64xbf16> to vector<16x64xbf16>
    %c0_5 = arith.constant 0 : index
    %c0_6 = arith.constant 0 : index
    %4 = vector.load %arg4[%c0_5, %c0_6] : memref<32x64xbf16, #tpu.memory_space<vmem>>, vector<32x64xbf16>
    %cst = arith.constant dense<0.000000e+00> : vector<32x16xf32>
    %5 = tpu.matmul %4, %1, %cst {dimension_numbers = #tpu.dot_dimension_numbers<[1], [0], [0], [1], [0, 0, 1, 1], [], []>} : vector<32x64xbf16>, vector<64x16xbf16>, vector<32x16xf32> -> vector<32x16xf32>
    %c0_7 = arith.constant 0 : index
    %c0_8 = arith.constant 0 : index
    %c0_9 = arith.constant 0 : index
    %6 = vector.load %arg5[%c0_7, %c0_8, %c0_9] : memref<2x64x16xbf16, #tpu.memory_space<vmem>>, vector<1x64x16xbf16>
    %7 = vector.shape_cast %6 : vector<1x64x16xbf16> to vector<64x16xbf16>
    %cst_10 = arith.constant dense<0.000000e+00> : vector<16x16xf32>
    %8 = tpu.matmul %3, %7, %cst_10 {dimension_numbers = #tpu.dot_dimension_numbers<[1], [0], [0], [1], [0, 0, 1, 1], [], []>} : vector<16x64xbf16>, vector<64x16xbf16>, vector<16x16xf32> -> vector<16x16xf32>
    %9 = vector.extract_strided_slice %5 {offsets = [0, 0], sizes = [16, 16], strides = [1, 1]} : vector<32x16xf32> to vector<16x16xf32>
    %10 = arith.addf %9, %8 : vector<16x16xf32>
    %c0_11 = arith.constant 0 : index
    %c0_12 = arith.constant 0 : index
    %c0_13 = arith.constant 0 : index
    %11 = vector.load %arg6[%c0_11, %c0_12, %c0_13] : memref<1x32x16xf32, #tpu.memory_space<vmem>>, vector<1x16x16xf32>
    %12 = vector.shape_cast %11 : vector<1x16x16xf32> to vector<16x16xf32>
    %13 = vector.shape_cast %10 : vector<16x16xf32> to vector<1x16x16xf32>
    tpu.vector_store %arg6[%c0_11, %c0_12, %c0_13], %13 {strides = array<i32>} : memref<1x32x16xf32, #tpu.memory_space<vmem>>, vector<1x16x16xf32>,
    %c1 = arith.constant 1 : index
    %c0_14 = arith.constant 0 : index
    %c0_15 = arith.constant 0 : index
    %14 = vector.load %arg5[%c1, %c0_14, %c0_15] : memref<2x64x16xbf16, #tpu.memory_space<vmem>>, vector<1x64x16xbf16>
    %15 = vector.shape_cast %14 : vector<1x64x16xbf16> to vector<64x16xbf16>
    %cst_16 = arith.constant dense<0.000000e+00> : vector<16x16xf32>
    %16 = tpu.matmul %3, %15, %cst_16 {dimension_numbers = #tpu.dot_dimension_numbers<[1], [0], [0], [1], [0, 0, 1, 1], [], []>} : vector<16x64xbf16>, vector<64x16xbf16>, vector<16x16xf32> -> vector<16x16xf32>
    %17 = vector.extract_strided_slice %5 {offsets = [16, 0], sizes = [16, 16], strides = [1, 1]} : vector<32x16xf32> to vector<16x16xf32>
    %18 = arith.addf %17, %16 : vector<16x16xf32>
    %c0_17 = arith.constant 0 : index
    %c16 = arith.constant 16 : index
    %c0_18 = arith.constant 0 : index
    %19 = vector.load %arg6[%c0_17, %c16, %c0_18] : memref<1x32x16xf32, #tpu.memory_space<vmem>>, vector<1x16x16xf32>
    %20 = vector.shape_cast %19 : vector<1x16x16xf32> to vector<16x16xf32>
    %21 = vector.shape_cast %18 : vector<16x16xf32> to vector<1x16x16xf32>
    tpu.vector_store %arg6[%c0_17, %c16, %c0_18], %21 {strides = array<i32>} : memref<1x32x16xf32, #tpu.memory_space<vmem>>, vector<1x16x16xf32>,
    return
  }
  func.func @transform_0(%arg0: i32, %arg1: i32) -> (i32, i32, i32) {
    %c0_i32 = arith.constant 0 : i32
    %c0_i32_0 = arith.constant 0 : i32
    %c0_i32_1 = arith.constant 0 : i32
    return %arg1, %c0_i32, %c0_i32_0 : i32, i32, i32
  }
  func.func @transform_1(%arg0: i32, %arg1: i32) -> (i32, i32, i32) {
    %c0_i32 = arith.constant 0 : i32
    %c0_i32_0 = arith.constant 0 : i32
    %c0_i32_1 = arith.constant 0 : i32
    return %arg1, %c0_i32, %c0_i32_0 : i32, i32, i32
  }
  func.func @transform_2(%arg0: i32, %arg1: i32) -> (i32, i32) {
    %c0_i32 = arith.constant 0 : i32
    %c0_i32_0 = arith.constant 0 : i32
    return %arg0, %c0_i32 : i32, i32
  }
  func.func @transform_3(%arg0: i32, %arg1: i32) -> (i32, i32, i32) {
    %c0_i32 = arith.constant 0 : i32
    %c0_i32_0 = arith.constant 0 : i32
    %c0_i32_1 = arith.constant 0 : i32
    return %arg0, %c0_i32, %c0_i32_0 : i32, i32, i32
  }
  func.func @transform_4(%arg0: i32, %arg1: i32) -> (i32, i32, i32) {
    %c0_i32 = arith.constant 0 : i32
    %c0_i32_0 = arith.constant 0 : i32
    return %arg1, %arg0, %c0_i32 : i32, i32, i32
  }
}

module attributes {stable_mosaic.version = 11 : i64} {
  func.func @_ff_kernel(%arg0: i32, %arg1: i32, %arg2: memref<1x4x128xf32, #tpu.memory_space<vmem>>, %arg3: memref<1x4x128xf32, #tpu.memory_space<vmem>>, %arg4: memref<8x4xbf16, #tpu.memory_space<vmem>>, %arg5: memref<8x1xf32, #tpu.memory_space<vmem>>, %arg6: memref<8x1xf32, #tpu.memory_space<vmem>>, %arg7: memref<8x1xf32, #tpu.memory_space<vmem>>, %arg8: memref<4x8xbf16, #tpu.memory_space<vmem>>, %arg9: memref<4x1xf32, #tpu.memory_space<vmem>>, %arg10: memref<1x4x128xf32, #tpu.memory_space<vmem>>) attributes {dimension_semantics = [#tpu.dimension_semantics<parallel>, #tpu.dimension_semantics<parallel>], iteration_bounds = array<i64: 2, 2>, scalar_prefetch = 0 : i64, scratch_operands = 0 : i64, tpu.core_type = #tpu.core_type<tc>, window_params = [{transform_indices = @transform_0, window_bounds = array<i64: 1, 4, 128>}, {transform_indices = @transform_1, window_bounds = array<i64: 1, 4, 128>}, {pipeline_mode = #tpu.pipeline_mode<synchronous>, transform_indices = @transform_2, window_bounds = array<i64: 8, 4>}, {pipeline_mode = #tpu.pipeline_mode<synchronous>, transform_indices = @transform_3, window_bounds = array<i64: 8, 1>}, {pipeline_mode = #tpu.pipeline_mode<synchronous>, transform_indices = @transform_4, window_bounds = array<i64: 8, 1>}, {pipeline_mode = #tpu.pipeline_mode<synchronous>, transform_indices = @transform_5, window_bounds = array<i64: 8, 1>}, {pipeline_mode = #tpu.pipeline_mode<synchronous>, transform_indices = @transform_6, window_bounds = array<i64: 4, 8>}, {pipeline_mode = #tpu.pipeline_mode<synchronous>, transform_indices = @transform_7, window_bounds = array<i64: 4, 1>}, {transform_indices = @transform_8, window_bounds = array<i64: 1, 4, 128>}]} {
    %c0 = arith.constant 0 : index
    %c0_0 = arith.constant 0 : index
    %c0_1 = arith.constant 0 : index
    %0 = vector.load %arg2[%c0, %c0_0, %c0_1] : memref<1x4x128xf32, #tpu.memory_space<vmem>>, vector<1x4x128xf32>
    %1 = vector.shape_cast %0 : vector<1x4x128xf32> to vector<4x128xf32>
    %2 = arith.truncf %1 : vector<4x128xf32> to vector<4x128xbf16>
    %c0_2 = arith.constant 0 : index
    %c0_3 = arith.constant 0 : index
    %3 = vector.load %arg4[%c0_2, %c0_3] : memref<8x4xbf16, #tpu.memory_space<vmem>>, vector<8x4xbf16>
    %cst = arith.constant dense<0.000000e+00> : vector<8x128xf32>
    %4 = tpu.matmul %3, %2, %cst {dimension_numbers = #tpu.dot_dimension_numbers<[1], [0], [0], [1], [0, 0, 1, 1], [], []>} : vector<8x4xbf16>, vector<4x128xbf16>, vector<8x128xf32> -> vector<8x128xf32>
    %c0_4 = arith.constant 0 : index
    %c0_5 = arith.constant 0 : index
    %5 = vector.load %arg5[%c0_4, %c0_5] : memref<8x1xf32, #tpu.memory_space<vmem>>, vector<8x1xf32>
    %6 = vector.broadcast %5 : vector<8x1xf32> to vector<8x128xf32>
    %7 = arith.addf %4, %6 : vector<8x128xf32>
    %cst_6 = arith.constant 0.000000e+00 : f32
    %8 = vector.broadcast %cst_6 : f32 to vector<8x128xf32>
    %9 = arith.maximumf %7, %8 : vector<8x128xf32>
    %cst_7 = arith.constant dense<0.000000e+00> : vector<128xf32>
    %10 = vector.multi_reduction <add>, %9, %cst_7 [0] : vector<8x128xf32> to vector<128xf32>
    %11 = vector.shape_cast %10 : vector<128xf32> to vector<1x128xf32>
    %cst_8 = arith.constant 8.000000e+00 : f32
    %12 = vector.broadcast %cst_8 : f32 to vector<1x128xf32>
    %13 = arith.divf %11, %12 : vector<1x128xf32>
    %14 = vector.broadcast %13 : vector<1x128xf32> to vector<8x128xf32>
    %15 = arith.subf %9, %14 : vector<8x128xf32>
    %16 = arith.mulf %15, %15 : vector<8x128xf32>
    %cst_9 = arith.constant dense<0.000000e+00> : vector<128xf32>
    %17 = vector.multi_reduction <add>, %16, %cst_9 [0] : vector<8x128xf32> to vector<128xf32>
    %18 = vector.shape_cast %17 : vector<128xf32> to vector<1x128xf32>
    %cst_10 = arith.constant 8.000000e+00 : f32
    %19 = vector.broadcast %cst_10 : f32 to vector<1x128xf32>
    %20 = arith.divf %18, %19 : vector<1x128xf32>
    %cst_11 = arith.constant 9.99999974E-6 : f32
    %21 = vector.broadcast %cst_11 : f32 to vector<1x128xf32>
    %22 = arith.addf %20, %21 : vector<1x128xf32>
    %23 = math.rsqrt %22 : vector<1x128xf32>
    %24 = vector.broadcast %23 : vector<1x128xf32> to vector<8x128xf32>
    %25 = arith.mulf %15, %24 : vector<8x128xf32>
    %c0_12 = arith.constant 0 : index
    %c0_13 = arith.constant 0 : index
    %26 = vector.load %arg6[%c0_12, %c0_13] : memref<8x1xf32, #tpu.memory_space<vmem>>, vector<8x1xf32>
    %27 = vector.broadcast %26 : vector<8x1xf32> to vector<8x128xf32>
    %28 = arith.mulf %25, %27 : vector<8x128xf32>
    %c0_14 = arith.constant 0 : index
    %c0_15 = arith.constant 0 : index
    %29 = vector.load %arg7[%c0_14, %c0_15] : memref<8x1xf32, #tpu.memory_space<vmem>>, vector<8x1xf32>
    %30 = vector.broadcast %29 : vector<8x1xf32> to vector<8x128xf32>
    %31 = arith.addf %28, %30 : vector<8x128xf32>
    %c0_16 = arith.constant 0 : index
    %c0_17 = arith.constant 0 : index
    %32 = vector.load %arg8[%c0_16, %c0_17] : memref<4x8xbf16, #tpu.memory_space<vmem>>, vector<4x8xbf16>
    %33 = arith.truncf %31 : vector<8x128xf32> to vector<8x128xbf16>
    %cst_18 = arith.constant dense<0.000000e+00> : vector<4x128xf32>
    %34 = tpu.matmul %32, %33, %cst_18 {dimension_numbers = #tpu.dot_dimension_numbers<[1], [0], [0], [1], [0, 0, 1, 1], [], []>} : vector<4x8xbf16>, vector<8x128xbf16>, vector<4x128xf32> -> vector<4x128xf32>
    %c0_19 = arith.constant 0 : index
    %c0_20 = arith.constant 0 : index
    %35 = vector.load %arg9[%c0_19, %c0_20] : memref<4x1xf32, #tpu.memory_space<vmem>>, vector<4x1xf32>
    %36 = vector.broadcast %35 : vector<4x1xf32> to vector<4x128xf32>
    %37 = arith.addf %34, %36 : vector<4x128xf32>
    %c0_21 = arith.constant 0 : index
    %c0_22 = arith.constant 0 : index
    %c0_23 = arith.constant 0 : index
    %38 = vector.load %arg3[%c0_21, %c0_22, %c0_23] : memref<1x4x128xf32, #tpu.memory_space<vmem>>, vector<1x4x128xf32>
    %39 = vector.shape_cast %38 : vector<1x4x128xf32> to vector<4x128xf32>
    %40 = arith.addf %37, %39 : vector<4x128xf32>
    %c0_24 = arith.constant 0 : index
    %c0_25 = arith.constant 0 : index
    %c0_26 = arith.constant 0 : index
    %41 = vector.load %arg10[%c0_24, %c0_25, %c0_26] : memref<1x4x128xf32, #tpu.memory_space<vmem>>, vector<1x4x128xf32>
    %42 = vector.shape_cast %41 : vector<1x4x128xf32> to vector<4x128xf32>
    %43 = vector.shape_cast %40 : vector<4x128xf32> to vector<1x4x128xf32>
    tpu.vector_store %arg10[%c0_24, %c0_25, %c0_26], %43 {strides = array<i32>} : memref<1x4x128xf32, #tpu.memory_space<vmem>>, vector<1x4x128xf32>,
    return
  }
  func.func @transform_0(%arg0: i32, %arg1: i32) -> (i32, i32, i32) {
    %c0_i32 = arith.constant 0 : i32
    %c0_i32_0 = arith.constant 0 : i32
    return %arg0, %c0_i32, %arg1 : i32, i32, i32
  }
  func.func @transform_1(%arg0: i32, %arg1: i32) -> (i32, i32, i32) {
    %c0_i32 = arith.constant 0 : i32
    %c0_i32_0 = arith.constant 0 : i32
    return %arg0, %c0_i32, %arg1 : i32, i32, i32
  }
  func.func @transform_2(%arg0: i32, %arg1: i32) -> (i32, i32) {
    %c0_i32 = arith.constant 0 : i32
    %c0_i32_0 = arith.constant 0 : i32
    %c0_i32_1 = arith.constant 0 : i32
    return %c0_i32, %c0_i32_0 : i32, i32
  }
  func.func @transform_3(%arg0: i32, %arg1: i32) -> (i32, i32) {
    %c0_i32 = arith.constant 0 : i32
    %c0_i32_0 = arith.constant 0 : i32
    %c0_i32_1 = arith.constant 0 : i32
    return %c0_i32, %c0_i32_0 : i32, i32
  }
  func.func @transform_4(%arg0: i32, %arg1: i32) -> (i32, i32) {
    %c0_i32 = arith.constant 0 : i32
    %c0_i32_0 = arith.constant 0 : i32
    %c0_i32_1 = arith.constant 0 : i32
    return %c0_i32, %c0_i32_0 : i32, i32
  }
  func.func @transform_5(%arg0: i32, %arg1: i32) -> (i32, i32) {
    %c0_i32 = arith.constant 0 : i32
    %c0_i32_0 = arith.constant 0 : i32
    %c0_i32_1 = arith.constant 0 : i32
    return %c0_i32, %c0_i32_0 : i32, i32
  }
  func.func @transform_6(%arg0: i32, %arg1: i32) -> (i32, i32) {
    %c0_i32 = arith.constant 0 : i32
    %c0_i32_0 = arith.constant 0 : i32
    %c0_i32_1 = arith.constant 0 : i32
    return %c0_i32, %c0_i32_0 : i32, i32
  }
  func.func @transform_7(%arg0: i32, %arg1: i32) -> (i32, i32) {
    %c0_i32 = arith.constant 0 : i32
    %c0_i32_0 = arith.constant 0 : i32
    %c0_i32_1 = arith.constant 0 : i32
    return %c0_i32, %c0_i32_0 : i32, i32
  }
  func.func @transform_8(%arg0: i32, %arg1: i32) -> (i32, i32, i32) {
    %c0_i32 = arith.constant 0 : i32
    %c0_i32_0 = arith.constant 0 : i32
    return %arg0, %c0_i32, %arg1 : i32, i32, i32
  }
}

</mosaic_0001>

<llo_original>
// kernel: factor_fno2d_block.3
$region0: #{factor_fno2d_block.3}
  #allocation0 [shape = 'u32[]', space=smem, size = 0x4, offset = 0x4, fixed_abs, tag = 'smem constant byte address 0x4 - core index']
  #allocation1 [shape = 'u32[72,128]{1,0:T(1,128)}', space=vmem, size = 0x9000, scoped, tag = 'internal scratch']
  %s0 = inlined_call_operand.vmem [shape: f32[2,4,256], index: 0, kind: input, shape index: {}]
  %s1 = inlined_call_operand.vmem [shape: f32[2,4,256], index: 1, kind: input, shape index: {}]
  %s2 = inlined_call_operand.vmem [shape: bf16[8,4], index: 2, kind: input, shape index: {}]
  %s3 = inlined_call_operand.vmem [shape: f32[8,1], index: 3, kind: input, shape index: {}]
  %s4 = inlined_call_operand.vmem [shape: f32[8,1], index: 4, kind: input, shape index: {}]
  %s5 = inlined_call_operand.vmem [shape: f32[8,1], index: 5, kind: input, shape index: {}]
  %s6 = inlined_call_operand.vmem [shape: bf16[4,8], index: 6, kind: input, shape index: {}]
  %s7 = inlined_call_operand.vmem [shape: f32[4,1], index: 7, kind: input, shape index: {}]
  %s8 = inlined_call_operand.vmem [shape: f32[2,4,256], index: 8, kind: output, shape index: {}]
  %s9 = sld [smem:[#allocation0]]
  $region65: #{factor_fno2d_block.3} parent=0
    _
  %s11 = ssub.s32 1, %s9
  %s12 = scalar_select 0, %s11, %s9
  loop: start=0, step=1, limit=6
  $region2: #{factor_fno2d_block.3} parent=0 // loop_pre_header
    _
  $region3: #{factor_fno2d_block.3} parent=0 // loop_header
    %s14 = sphi 0, %s18
    %p15 = scmp.ge.s32.totalorder %s14, 6
    %s21 = sphi 0, %s33
    %s22 = sphi 0, %s29
    %s23 = sphi 0, %s21
    %s24 = sphi 0, %s22
    %s25 = sphi 0, %s23
    %s26 = sphi 0, %s24
    %s38 = sphi 0, %s40
    %s41 = sphi 0, %s38
    %s42 = sphi 0, %s41
    %s58 = sphi 0, %s42
    %s66 = sphi 0, %s68
    %s69 = sphi 0, %s66
    %s70 = sphi 0, %s69
    %s86 = sphi 0, %s70
    %s90 = sphi 0, %s90
    %s92 = sphi 0, %s90
    %s93 = sphi 0, %s92
    %s107 = sphi 0, %s93
    %s111 = sphi 0, %s111
    %s113 = sphi 0, %s111
    %s114 = sphi 0, %s113
    %s128 = sphi 0, %s114
    %s132 = sphi 0, %s132
    %s134 = sphi 0, %s132
    %s135 = sphi 0, %s134
    %s149 = sphi 0, %s135
    %s153 = sphi 0, %s153
    %s155 = sphi 0, %s153
    %s156 = sphi 0, %s155
    %s170 = sphi 0, %s156
    %s174 = sphi 0, %s174
    %s176 = sphi 0, %s174
    %s177 = sphi 0, %s176
    %s191 = sphi 0, %s177
    %s195 = sphi 0, %s195
    %s197 = sphi 0, %s195
    %s198 = sphi 0, %s197
    %s212 = sphi 0, %s198
    %s220 = sphi 0, %s222
    %s223 = sphi 0, %s220
    %s224 = sphi 0, %s223
    %s240 = sphi 0, %s224
  $region4: #{factor_fno2d_block.3} parent=0 // loop_header_branch
    %17 = sbr.rel (%p15) target = $region8
  $region5: #{factor_fno2d_block.3} parent=0 // loop_body
    %s19 = ssub.s32 %s14, 1
    %s20 = ssub.s32 %s14, 2
    %s27 = sadd.s32 1, %s22
    %p28 = scmp.ge.s32.totalorder %s27, 2
    %s29 = scalar_select %p28, 0, %s27
    %s30 = sadd.s32 1, %s21
    %s31 = scalar_select %p28, %s30, %s21
    %p32 = scmp.ge.s32.totalorder %s31, 2
    %s33 = scalar_select %p32, 0, %s31
    %s34 = ssub.s32 %s21, %s33
    %s35 = ssub.s32 %s22, %s29
    %s36 = sor.u32 %s34, %s35
    %p37 = scmp.eq.s32.totalorder %s36, 0
    %s39 = sadd.s32 %s38, 1
    %s40 = scalar_select %p37, %s38, %s39
    %p43 = pneg %p37
    %p44 = scmp.eq.s32.totalorder %s14, 3
    %p45 = por %p43, %p44
    %p46 = scmp.ne.s32.totalorder %s38, %s41
    %p47 = scmp.eq.s32.totalorder %s14, 0
    %p48 = por %p46, %p47
    %p49 = scmp.ne.s32.totalorder %s38, %s41
    %p50 = scmp.eq.s32.totalorder %s19, 3
    %p51 = por %p49, %p50
    %p52 = scmp.ne.s32.totalorder %s41, %s42
    %p53 = scmp.eq.s32.totalorder %s19, 0
    %p54 = por %p52, %p53
    %p55 = scmp.ne.s32.totalorder %s41, %s42
    %p56 = scmp.eq.s32.totalorder %s20, 3
    %p57 = por %p55, %p56
    %p59 = scmp.ne.s32.totalorder %s42, %s58
    %p60 = scmp.eq.s32.totalorder %s20, 0
    %p61 = por %p59, %p60
    %s62 = ssub.s32 %s21, %s33
    %s63 = ssub.s32 %s22, %s29
    %s64 = sor.u32 %s62, %s63
    %p65 = scmp.eq.s32.totalorder %s64, 0
    %s67 = sadd.s32 %s66, 1
    %s68 = scalar_select %p65, %s66, %s67
    %p71 = pneg %p65
    %p72 = scmp.eq.s32.totalorder %s14, 3
    %p73 = por %p71, %p72
    %p74 = scmp.ne.s32.totalorder %s66, %s69
    %p75 = scmp.eq.s32.totalorder %s14, 0
    %p76 = por %p74, %p75
    %p77 = scmp.ne.s32.totalorder %s66, %s69
    %p78 = scmp.eq.s32.totalorder %s19, 3
    %p79 = por %p77, %p78
    %p80 = scmp.ne.s32.totalorder %s69, %s70
    %p81 = scmp.eq.s32.totalorder %s19, 0
    %p82 = por %p80, %p81
    %p83 = scmp.ne.s32.totalorder %s69, %s70
    %p84 = scmp.eq.s32.totalorder %s20, 3
    %p85 = por %p83, %p84
    %p87 = scmp.ne.s32.totalorder %s70, %s86
    %p88 = scmp.eq.s32.totalorder %s20, 0
    %p89 = por %p87, %p88
    %s91 = sadd.s32 %s90, 1
    %p94 = scmp.eq.s32.totalorder %s14, 3
    %p95 = scmp.ne.s32.totalorder %s90, %s92
    %p96 = scmp.eq.s32.totalorder %s14, 0
    %p97 = por %p95, %p96
    %p98 = scmp.ne.s32.totalorder %s90, %s92
    %p99 = scmp.eq.s32.totalorder %s19, 3
    %p100 = por %p98, %p99
    %p101 = scmp.ne.s32.totalorder %s92, %s93
    %p102 = scmp.eq.s32.totalorder %s19, 0
    %p103 = por %p101, %p102
    %p104 = scmp.ne.s32.totalorder %s92, %s93
    %p105 = scmp.eq.s32.totalorder %s20, 3
    %p106 = por %p104, %p105
    %p108 = scmp.ne.s32.totalorder %s93, %s107
    %p109 = scmp.eq.s32.totalorder %s20, 0
    %p110 = por %p108, %p109
    %s112 = sadd.s32 %s111, 1
    %p115 = scmp.eq.s32.totalorder %s14, 3
    %p116 = scmp.ne.s32.totalorder %s111, %s113
    %p117 = scmp.eq.s32.totalorder %s14, 0
    %p118 = por %p116, %p117
    %p119 = scmp.ne.s32.totalorder %s111, %s113
    %p120 = scmp.eq.s32.totalorder %s19, 3
    %p121 = por %p119, %p120
    %p122 = scmp.ne.s32.totalorder %s113, %s114
    %p123 = scmp.eq.s32.totalorder %s19, 0
    %p124 = por %p122, %p123
    %p125 = scmp.ne.s32.totalorder %s113, %s114
    %p126 = scmp.eq.s32.totalorder %s20, 3
    %p127 = por %p125, %p126
    %p129 = scmp.ne.s32.totalorder %s114, %s128
    %p130 = scmp.eq.s32.totalorder %s20, 0
    %p131 = por %p129, %p130
    %s133 = sadd.s32 %s132, 1
    %p136 = scmp.eq.s32.totalorder %s14, 3
    %p137 = scmp.ne.s32.totalorder %s132, %s134
    %p138 = scmp.eq.s32.totalorder %s14, 0
    %p139 = por %p137, %p138
    %p140 = scmp.ne.s32.totalorder %s132, %s134
    %p141 = scmp.eq.s32.totalorder %s19, 3
    %p142 = por %p140, %p141
    %p143 = scmp.ne.s32.totalorder %s134, %s135
    %p144 = scmp.eq.s32.totalorder %s19, 0
    %p145 = por %p143, %p144
    %p146 = scmp.ne.s32.totalorder %s134, %s135
    %p147 = scmp.eq.s32.totalorder %s20, 3
    %p148 = por %p146, %p147
    %p150 = scmp.ne.s32.totalorder %s135, %s149
    %p151 = scmp.eq.s32.totalorder %s20, 0
    %p152 = por %p150, %p151
    %s154 = sadd.s32 %s153, 1
    %p157 = scmp.eq.s32.totalorder %s14, 3
    %p158 = scmp.ne.s32.totalorder %s153, %s155
    %p159 = scmp.eq.s32.totalorder %s14, 0
    %p160 = por %p158, %p159
    %p161 = scmp.ne.s32.totalorder %s153, %s155
    %p162 = scmp.eq.s32.totalorder %s19, 3
    %p163 = por %p161, %p162
    %p164 = scmp.ne.s32.totalorder %s155, %s156
    %p165 = scmp.eq.s32.totalorder %s19, 0
    %p166 = por %p164, %p165
    %p167 = scmp.ne.s32.totalorder %s155, %s156
    %p168 = scmp.eq.s32.totalorder %s20, 3
    %p169 = por %p167, %p168
    %p171 = scmp.ne.s32.totalorder %s156, %s170
    %p172 = scmp.eq.s32.totalorder %s20, 0
    %p173 = por %p171, %p172
    %s175 = sadd.s32 %s174, 1
    %p178 = scmp.eq.s32.totalorder %s14, 3
    %p179 = scmp.ne.s32.totalorder %s174, %s176
    %p180 = scmp.eq.s32.totalorder %s14, 0
    %p181 = por %p179, %p180
    %p182 = scmp.ne.s32.totalorder %s174, %s176
    %p183 = scmp.eq.s32.totalorder %s19, 3
    %p184 = por %p182, %p183
    %p185 = scmp.ne.s32.totalorder %s176, %s177
    %p186 = scmp.eq.s32.totalorder %s19, 0
    %p187 = por %p185, %p186
    %p188 = scmp.ne.s32.totalorder %s176, %s177
    %p189 = scmp.eq.s32.totalorder %s20, 3
    %p190 = por %p188, %p189
    %p192 = scmp.ne.s32.totalorder %s177, %s191
    %p193 = scmp.eq.s32.totalorder %s20, 0
    %p194 = por %p192, %p193
    %s196 = sadd.s32 %s195, 1
    %p199 = scmp.eq.s32.totalorder %s14, 3
    %p200 = scmp.ne.s32.totalorder %s195, %s197
    %p201 = scmp.eq.s32.totalorder %s14, 0
    %p202 = por %p200, %p201
    %p203 = scmp.ne.s32.totalorder %s195, %s197
    %p204 = scmp.eq.s32.totalorder %s19, 3
    %p205 = por %p203, %p204
    %p206 = scmp.ne.s32.totalorder %s197, %s198
    %p207 = scmp.eq.s32.totalorder %s19, 0
    %p208 = por %p206, %p207
    %p209 = scmp.ne.s32.totalorder %s197, %s198
    %p210 = scmp.eq.s32.totalorder %s20, 3
    %p211 = por %p209, %p210
    %p213 = scmp.ne.s32.totalorder %s198, %s212
    %p214 = scmp.eq.s32.totalorder %s20, 0
    %p215 = por %p213, %p214
    %s216 = ssub.s32 %s21, %s33
    %s217 = ssub.s32 %s22, %s29
    %s218 = sor.u32 %s216, %s217
    %p219 = scmp.eq.s32.totalorder %s218, 0
    %s221 = sadd.s32 %s220, 1
    %s222 = scalar_select %p219, %s220, %s221
    %p225 = pneg %p219
    %p226 = scmp.eq.s32.totalorder %s14, 3
    %p227 = por %p225, %p226
    %p228 = scmp.ne.s32.totalorder %s220, %s223
    %p229 = scmp.eq.s32.totalorder %s14, 0
    %p230 = por %p228, %p229
    %p231 = scmp.ne.s32.totalorder %s220, %s223
    %p232 = scmp.eq.s32.totalorder %s19, 3
    %p233 = por %p231, %p232
    %p234 = scmp.ne.s32.totalorder %s223, %s224
    %p235 = scmp.eq.s32.totalorder %s19, 0
    %p236 = por %p234, %p235
    %p237 = scmp.ne.s32.totalorder %s223, %s224
    %p238 = scmp.eq.s32.totalorder %s20, 3
    %p239 = por %p237, %p238
    %p241 = scmp.ne.s32.totalorder %s224, %s240
    %p242 = scmp.eq.s32.totalorder %s20, 0
    %p243 = por %p241, %p242
    %p244 = scmp.le.s32.totalorder 1, %s14
    %p245 = scmp.lt.s32.totalorder %s14, 5
    %p246 = pnand %p244, %p245
    %p247 = pneg %p246
    // Predicated region
    $region9: #{factor_fno2d_block.3} parent=5 // pred_check
      _
    $region10: #{factor_fno2d_block.3} parent=5 // pred_check_branch
      %249 = sbr.rel (%p246) target = $region12
    $region11: #{factor_fno2d_block.3} parent=5 // pred_region
      %s250 = ssub.s32 %s14, 1
      // Predicated region
      $region13: #{factor_fno2d_block.3} parent=11 // pred_check
        %p251 = pneg %p103
      $region14: #{factor_fno2d_block.3} parent=11 // pred_check_branch
        %253 = sbr.rel (%p251) target = $region16
      $region15: #{factor_fno2d_block.3} parent=11 // pred_region
        _
      $region16: #{factor_fno2d_block.3} parent=11 // pred_fallthru
        _
      // Predicated region
      $region17: #{factor_fno2d_block.3} parent=11 // pred_check
        %p254 = pneg %p124
      $region18: #{factor_fno2d_block.3} parent=11 // pred_check_branch
        %256 = sbr.rel (%p254) target = $region20
      $region19: #{factor_fno2d_block.3} parent=11 // pred_region
        _
      $region20: #{factor_fno2d_block.3} parent=11 // pred_fallthru
        _
      // Predicated region
      $region21: #{factor_fno2d_block.3} parent=11 // pred_check
        %p257 = pneg %p145
      $region22: #{factor_fno2d_block.3} parent=11 // pred_check_branch
        %259 = sbr.rel (%p257) target = $region24
      $region23: #{factor_fno2d_block.3} parent=11 // pred_region
        _
      $region24: #{factor_fno2d_block.3} parent=11 // pred_fallthru
        _
      // Predicated region
      $region25: #{factor_fno2d_block.3} parent=11 // pred_check
        %p260 = pneg %p166
      $region26: #{factor_fno2d_block.3} parent=11 // pred_check_branch
        %262 = sbr.rel (%p260) target = $region28
      $region27: #{factor_fno2d_block.3} parent=11 // pred_region
        _
      $region28: #{factor_fno2d_block.3} parent=11 // pred_fallthru
        _
      // Predicated region
      $region29: #{factor_fno2d_block.3} parent=11 // pred_check
        %p263 = pneg %p187
      $region30: #{factor_fno2d_block.3} parent=11 // pred_check_branch
        %265 = sbr.rel (%p263) target = $region32
      $region31: #{factor_fno2d_block.3} parent=11 // pred_region
        _
      $region32: #{factor_fno2d_block.3} parent=11 // pred_fallthru
        _
      // Predicated region
      $region33: #{factor_fno2d_block.3} parent=11 // pred_check
        %p266 = pneg %p208
      $region34: #{factor_fno2d_block.3} parent=11 // pred_check_branch
        %268 = sbr.rel (%p266) target = $region36
      $region35: #{factor_fno2d_block.3} parent=11 // pred_region
        _
      $region36: #{factor_fno2d_block.3} parent=11 // pred_fallthru
        _
    $region12: #{factor_fno2d_block.3} parent=5 // pred_fallthru
      _
    %p269 = scmp.lt.s32.totalorder %s14, 4
    // Predicated region
    $region37: #{factor_fno2d_block.3} parent=5 // pred_check
      %p270 = pneg %p269
    $region38: #{factor_fno2d_block.3} parent=5 // pred_check_branch
      %272 = sbr.rel (%p270) target = $region40
    $region39: #{factor_fno2d_block.3} parent=5 // pred_region
      // Predicated region
      $region41: #{factor_fno2d_block.3} parent=39 // pred_check
        %p273 = pneg %p48
      $region42: #{factor_fno2d_block.3} parent=39 // pred_check_branch
        %275 = sbr.rel (%p273) target = $region44
      $region43: #{factor_fno2d_block.3} parent=39 // pred_region
        %p276 = scmp.lt.s32.totalorder %s21, 1
        %s277 = scalar_select %p276, %s21, 1
        %p278 = scmp.lt.s32.totalorder %s22, 1
        %s279 = scalar_select %p278, %s22, 1
        %s280 = smul.addr %s277, 2
        %s281 = sadd.s32 %s279, %s280
        %s282 = smul.addr %s281, 4
        %s283 = scalar_lea.vmem %s0, %s282
      $region44: #{factor_fno2d_block.3} parent=39 // pred_fallthru
        _
      // Predicated region
      $region45: #{factor_fno2d_block.3} parent=39 // pred_check
        %p284 = pneg %p76
      $region46: #{factor_fno2d_block.3} parent=39 // pred_check_branch
        %286 = sbr.rel (%p284) target = $region48
      $region47: #{factor_fno2d_block.3} parent=39 // pred_region
        %p287 = scmp.lt.s32.totalorder %s21, 1
        %s288 = scalar_select %p287, %s21, 1
        %p289 = scmp.lt.s32.totalorder %s22, 1
        %s290 = scalar_select %p289, %s22, 1
        %s291 = smul.addr %s288, 2
        %s292 = sadd.s32 %s290, %s291
        %s293 = smul.addr %s292, 4
        %s294 = scalar_lea.vmem %s1, %s293
      $region48: #{factor_fno2d_block.3} parent=39 // pred_fallthru
        _
    $region40: #{factor_fno2d_block.3} parent=5 // pred_fallthru
      _
    %p295 = scmp.le.s32.totalorder 1, %s14
    %p296 = scmp.lt.s32.totalorder %s14, 5
    %p297 = pnand %p295, %p296
    %p298 = pneg %p297
    // Predicated region
    $region49: #{factor_fno2d_block.3} parent=5 // pred_check
      _
    $region50: #{factor_fno2d_block.3} parent=5 // pred_check_branch
      %300 = sbr.rel (%p297) target = $region52
    $region51: #{factor_fno2d_block.3} parent=5 // pred_region
      %s301 = ssub.s32 %s14, 1
      %p302 = scmp.lt.s32.totalorder %s23, 1
      %s303 = scalar_select %p302, %s23, 1
      %p304 = scmp.lt.s32.totalorder %s24, 1
      %s305 = scalar_select %p304, %s24, 1
      %s306 = smul.addr %s303, 2
      %s307 = sadd.s32 %s305, %s306
      %s308 = smul.addr %s307, 4
      %s309 = scalar_lea.vmem %s0, %s308
      %p310 = pneg %p54
      %p311 = pneg %p51
      %p312 = scmp.lt.s32.totalorder %s23, 1
      %s313 = scalar_select %p312, %s23, 1
      %p314 = scmp.lt.s32.totalorder %s24, 1
      %s315 = scalar_select %p314, %s24, 1
      %s316 = smul.addr %s313, 2
      %s317 = sadd.s32 %s315, %s316
      %s318 = smul.addr %s317, 4
      %s319 = scalar_lea.vmem %s1, %s318
      %p320 = pneg %p82
      %p321 = pneg %p79
      %p322 = pneg %p103
      %p323 = pneg %p100
      %p324 = pneg %p124
      %p325 = pneg %p121
      %p326 = pneg %p145
      %p327 = pneg %p142
      %p328 = pneg %p166
      %p329 = pneg %p163
      %p330 = pneg %p187
      %p331 = pneg %p184
      %p332 = pneg %p208
      %p333 = pneg %p205
      %p334 = pneg %p236
      %p335 = pneg %p233
      %p336 = scmp.lt.s32.totalorder %s23, 1
      %s337 = scalar_select %p336, %s23, 1
      %p338 = scmp.lt.s32.totalorder %s24, 1
      %s339 = scalar_select %p338, %s24, 1
      %s340 = smul.addr %s337, 2
      %s341 = sadd.s32 %s339, %s340
      %s342 = smul.addr %s341, 4
      %s343 = scalar_lea.vmem %s8, %s342
      %p344 = scmp.lt.s32.totalorder %s23, 1
      %s345 = scalar_select %p344, %s23, 1
      %p346 = scmp.lt.s32.totalorder %s24, 1
      %s347 = scalar_select %p346, %s24, 1
      %s348 = smul.addr %s345, 2
      %s349 = sadd.s32 %s347, %s348
      %s350 = smul.addr %s349, 4
      %s351 = scalar_lea.vmem %s0, %s350
      %p352 = scmp.lt.s32.totalorder %s23, 1
      %s353 = scalar_select %p352, %s23, 1
      %p354 = scmp.lt.s32.totalorder %s24, 1
      %s355 = scalar_select %p354, %s24, 1
      %s356 = smul.addr %s353, 2
      %s357 = sadd.s32 %s355, %s356
      %s358 = smul.addr %s357, 4
      %s359 = scalar_lea.vmem %s1, %s358
      %p360 = scmp.lt.s32.totalorder %s23, 1
      %s361 = scalar_select %p360, %s23, 1
      %p362 = scmp.lt.s32.totalorder %s24, 1
      %s363 = scalar_select %p362, %s24, 1
      %s364 = smul.addr %s361, 2
      %s365 = sadd.s32 %s363, %s364
      %s366 = smul.addr %s365, 4
      %s367 = scalar_lea.vmem %s8, %s366
      %v369 = vld [vmem:[%s351] sm:$0xf]
      %v370 = vpack.c.bf16 %v369, %v369
      %v371 = vld [vmem:[%s2] sm:$0xf]
      %v372 = vld [vmem:[%s3] sm:$0xff]
      %374 = vset.pattern.permute.xlu0 0
      %375 = vperm.xlu0 %374, %v372
      %v376 = vpop.permute.xlu0 %375
      %vm378 = vcmask 31744
      %v380 = vsel %vm378, %v371, 0
      %vm382 = vcmask 1041408
      %v384 = vsel %vm382, %v370, 0
      %386 = vmatpush.bf16.msra.mxu0 0
      %387 = vmatpush.bf16.msra.mxu0 0
      %388 = vmatpush.bf16.msra.mxu0 0
      %389 = vmatpush.bf16.msra.mxu0 0
      %390 = vmatpush.bf16.msra.mxu0 0
      %391 = vmatpush.bf16.msra.mxu0 0
      %392 = vmatpush.bf16.msra.mxu0 0
      %393 = vmatpush.bf16.msra.mxu0 %v384
      %394 = vmatmul.bf16.gmra.mxu0 %v380
      %v395 = vpop.f32.mrf.mxu0
      %v396 = vadd.f32 %v376, %v395
      %v397 = vpop.f32.mrf.mxu0
      %398 = vdwg.mxu0
      %v399 = vmax.f32 %v396, 0.0
      %v400 = vrot.slane %v399, 4
      %v401 = vadd.f32 %v399, %v400
      %v402 = vrot.slane %v401, 2
      %v403 = vadd.f32 %v401, %v402
      %v404 = vrot.slane %v403, 1
      %v405 = vadd.f32 %v403, %v404
      %v406 = vrcp.pop 8.0
      %v407 = vmul.f32 8.0, %v406
      %v408 = vsub.f32 1.0, %v407
      %v409 = vmul.f32 %v406, %v408
      %v410 = vadd.f32 %v406, %v409
      %vm411 = vweird.f32 %v406
      %v412 = vsel %vm411, %v406, %v410
      %v413 = vmul.f32 %v405, %v412
      %v414 = vsub.f32 %v399, %v413
      %v415 = vmul.f32 %v414, %v414
      %v416 = vrot.slane %v415, 4
      %v417 = vadd.f32 %v415, %v416
      %v418 = vrot.slane %v417, 2
      %v419 = vadd.f32 %v417, %v418
      %v420 = vrot.slane %v419, 1
      %v421 = vadd.f32 %v419, %v420
      %v422 = vmul.f32 %v421, %v412
      %v423 = vadd.f32 %v422, 1e-05
      %v424 = vrsqrt.pop %v423
      %v425 = vmul.f32 %v424, %v423
      %v426 = vmul.f32 %v425, %v424
      %v427 = vmul.f32 0.5, %v426
      %v428 = vsub.f32 1.5, %v427
      %v429 = vmul.f32 %v424, %v428
      %vm430 = vweird.f32 %v423
      %vm431 = vweird.f32 %v424
      %vm432 = vmor %vm430, %vm431
      %v433 = vsel %vm432, %v424, %v429
      %v434 = vmul.f32 %v414, %v433
      %v435 = vld [vmem:[%s4] sm:$0xff]
      %437 = vset.pattern.permute.xlu0 0
      %438 = vperm.xlu0 %437, %v435
      %v439 = vpop.permute.xlu0 %438
      %v441 = vmul.f32 %v434, %v439
      %v442 = vld [vmem:[%s5] sm:$0xff]
      %444 = vset.pattern.permute.xlu0 0
      %445 = vperm.xlu0 %444, %v442
      %v446 = vpop.permute.xlu0 %445
      %v448 = vadd.f32 %v441, %v446
      %v449 = vld [vmem:[%s6] sm:$0x3]
      %v450 = vpack.c.bf16 %v448, %v448
      %v451 = vld [vmem:[%s7] sm:$0xf]
      %453 = vset.pattern.permute.xlu0 0
      %454 = vperm.xlu0 %453, %v451
      %v455 = vpop.permute.xlu0 %454
      %vm457 = vcmask 64512
      %v459 = vsel %vm457, %v449, 0
      %vm461 = vcmask 1043456
      %v463 = vsel %vm461, %v450, 0
      %465 = vmatpush.bf16.msra.mxu0 0
      %466 = vmatpush.bf16.msra.mxu0 0
      %467 = vmatpush.bf16.msra.mxu0 0
      %468 = vmatpush.bf16.msra.mxu0 0
      %469 = vmatpush.bf16.msra.mxu0 0
      %470 = vmatpush.bf16.msra.mxu0 0
      %471 = vmatpush.bf16.msra.mxu0 0
      %472 = vmatpush.bf16.msra.mxu0 %v463
      %473 = vmatmul.bf16.gmra.mxu0 %v459
      %v474 = vpop.f32.mrf.mxu0
      %v475 = vadd.f32 %v455, %v474
      %v476 = vpop.f32.mrf.mxu0
      %477 = vdwg.mxu0
      %v478 = vld [vmem:[%s359] sm:$0xf]
      %v479 = vadd.f32 %v475, %v478
      %480 = vst [vmem:[%s367] sm:$0xf] %v479
      %p481 = scmp.lt.s32.totalorder %s23, 1
      %s482 = scalar_select %p481, %s23, 1
      %p483 = scmp.lt.s32.totalorder %s24, 1
      %s484 = scalar_select %p483, %s24, 1
      %s485 = smul.addr %s482, 2
      %s486 = sadd.s32 %s484, %s485
      %s487 = smul.addr %s486, 4
      %s488 = scalar_lea.vmem %s8, %s487
      // Predicated region
      $region53: #{factor_fno2d_block.3} parent=51 // pred_check
        %p489 = pneg %p233
      $region54: #{factor_fno2d_block.3} parent=51 // pred_check_branch
        %491 = sbr.rel (%p489) target = $region56
      $region55: #{factor_fno2d_block.3} parent=51 // pred_region
        _
      $region56: #{factor_fno2d_block.3} parent=51 // pred_fallthru
        _
    $region52: #{factor_fno2d_block.3} parent=5 // pred_fallthru
      _
    %p492 = scmp.le.s32.totalorder 2, %s14
    // Predicated region
    $region57: #{factor_fno2d_block.3} parent=5 // pred_check
      %p493 = pneg %p492
    $region58: #{factor_fno2d_block.3} parent=5 // pred_check_branch
      %495 = sbr.rel (%p493) target = $region60
    $region59: #{factor_fno2d_block.3} parent=5 // pred_region
      %s496 = ssub.s32 %s14, 2
      // Predicated region
      $region61: #{factor_fno2d_block.3} parent=59 // pred_check
        %p497 = pneg %p239
      $region62: #{factor_fno2d_block.3} parent=59 // pred_check_branch
        %499 = sbr.rel (%p497) target = $region64
      $region63: #{factor_fno2d_block.3} parent=59 // pred_region
        %p500 = scmp.lt.s32.totalorder %s25, 1
        %s501 = scalar_select %p500, %s25, 1
        %p502 = scmp.lt.s32.totalorder %s26, 1
        %s503 = scalar_select %p502, %s26, 1
        %s504 = smul.addr %s501, 2
        %s505 = sadd.s32 %s503, %s504
        %s506 = smul.addr %s505, 4
        %s507 = scalar_lea.vmem %s8, %s506
      $region64: #{factor_fno2d_block.3} parent=59 // pred_fallthru
        _
    $region60: #{factor_fno2d_block.3} parent=5 // pred_fallthru
      _
  $region6: #{factor_fno2d_block.3} parent=0 // loop_footer
    %s18 = sadd.s32 1, %s14
  $region7: #{factor_fno2d_block.3} parent=0 // loop_footer_branch
    %13 = sbr.rel target = $region3
  $region8: #{factor_fno2d_block.3} parent=0 // loop_exit
    _

// kernel: factor_fno2d_block.2
$region0: #{factor_fno2d_block.2}
  #allocation0 [shape = 'u32[]', space=smem, size = 0x4, offset = 0x4, fixed_abs, tag = 'smem constant byte address 0x4 - core index']
  #allocation1 [shape = 'u32[72,128]{1,0:T(1,128)}', space=vmem, size = 0x9000, scoped, tag = 'internal scratch']
  %s0 = inlined_call_operand.vmem [shape: bf16[2,64,16], index: 0, kind: input, shape index: {}]
  %s1 = inlined_call_operand.vmem [shape: bf16[2,16,64], index: 1, kind: input, shape index: {}]
  %s2 = inlined_call_operand.vmem [shape: bf16[64,64], index: 2, kind: input, shape index: {}]
  %s3 = inlined_call_operand.vmem [shape: bf16[4,64,16], index: 3, kind: input, shape index: {}]
  %s4 = inlined_call_operand.vmem [shape: f32[2,64,16], index: 4, kind: output, shape index: {}]
  %s5 = sld [smem:[#allocation0]]
  $region49: #{factor_fno2d_block.2} parent=0
    _
  %s7 = ssub.s32 1, %s5
  %s8 = scalar_select 0, %s7, %s5
  loop: start=0, step=1, limit=6
  $region2: #{factor_fno2d_block.2} parent=0 // loop_pre_header
    _
  $region3: #{factor_fno2d_block.2} parent=0 // loop_header
    %s10 = sphi 0, %s14
    %p11 = scmp.ge.s32.totalorder %s10, 6
    %s17 = sphi 0, %s29
    %s18 = sphi 0, %s25
    %s19 = sphi 0, %s17
    %s20 = sphi 0, %s18
    %s21 = sphi 0, %s19
    %s22 = sphi 0, %s20
    %s32 = sphi 0, %s34
    %s35 = sphi 0, %s32
    %s36 = sphi 0, %s35
    %s52 = sphi 0, %s36
    %s58 = sphi 0, %s60
    %s61 = sphi 0, %s58
    %s62 = sphi 0, %s61
    %s78 = sphi 0, %s62
    %s84 = sphi 0, %s86
    %s87 = sphi 0, %s84
    %s88 = sphi 0, %s87
    %s104 = sphi 0, %s88
    %s110 = sphi 0, %s112
    %s113 = sphi 0, %s110
    %s114 = sphi 0, %s113
    %s130 = sphi 0, %s114
    %s138 = sphi 0, %s140
    %s141 = sphi 0, %s138
    %s142 = sphi 0, %s141
    %s158 = sphi 0, %s142
  $region4: #{factor_fno2d_block.2} parent=0 // loop_header_branch
    %13 = sbr.rel (%p11) target = $region8
  $region5: #{factor_fno2d_block.2} parent=0 // loop_body
    %s15 = ssub.s32 %s10, 1
    %s16 = ssub.s32 %s10, 2
    %s23 = sadd.s32 1, %s18
    %p24 = scmp.ge.s32.totalorder %s23, 2
    %s25 = scalar_select %p24, 0, %s23
    %s26 = sadd.s32 1, %s17
    %s27 = scalar_select %p24, %s26, %s17
    %p28 = scmp.ge.s32.totalorder %s27, 2
    %s29 = scalar_select %p28, 0, %s27
    %s30 = ssub.s32 %s18, %s25
    %p31 = scmp.eq.s32.totalorder %s30, 0
    %s33 = sadd.s32 %s32, 1
    %s34 = scalar_select %p31, %s32, %s33
    %p37 = pneg %p31
    %p38 = scmp.eq.s32.totalorder %s10, 3
    %p39 = por %p37, %p38
    %p40 = scmp.ne.s32.totalorder %s32, %s35
    %p41 = scmp.eq.s32.totalorder %s10, 0
    %p42 = por %p40, %p41
    %p43 = scmp.ne.s32.totalorder %s32, %s35
    %p44 = scmp.eq.s32.totalorder %s15, 3
    %p45 = por %p43, %p44
    %p46 = scmp.ne.s32.totalorder %s35, %s36
    %p47 = scmp.eq.s32.totalorder %s15, 0
    %p48 = por %p46, %p47
    %p49 = scmp.ne.s32.totalorder %s35, %s36
    %p50 = scmp.eq.s32.totalorder %s16, 3
    %p51 = por %p49, %p50
    %p53 = scmp.ne.s32.totalorder %s36, %s52
    %p54 = scmp.eq.s32.totalorder %s16, 0
    %p55 = por %p53, %p54
    %s56 = ssub.s32 %s18, %s25
    %p57 = scmp.eq.s32.totalorder %s56, 0
    %s59 = sadd.s32 %s58, 1
    %s60 = scalar_select %p57, %s58, %s59
    %p63 = pneg %p57
    %p64 = scmp.eq.s32.totalorder %s10, 3
    %p65 = por %p63, %p64
    %p66 = scmp.ne.s32.totalorder %s58, %s61
    %p67 = scmp.eq.s32.totalorder %s10, 0
    %p68 = por %p66, %p67
    %p69 = scmp.ne.s32.totalorder %s58, %s61
    %p70 = scmp.eq.s32.totalorder %s15, 3
    %p71 = por %p69, %p70
    %p72 = scmp.ne.s32.totalorder %s61, %s62
    %p73 = scmp.eq.s32.totalorder %s15, 0
    %p74 = por %p72, %p73
    %p75 = scmp.ne.s32.totalorder %s61, %s62
    %p76 = scmp.eq.s32.totalorder %s16, 3
    %p77 = por %p75, %p76
    %p79 = scmp.ne.s32.totalorder %s62, %s78
    %p80 = scmp.eq.s32.totalorder %s16, 0
    %p81 = por %p79, %p80
    %s82 = ssub.s32 %s17, %s29
    %p83 = scmp.eq.s32.totalorder %s82, 0
    %s85 = sadd.s32 %s84, 1
    %s86 = scalar_select %p83, %s84, %s85
    %p89 = pneg %p83
    %p90 = scmp.eq.s32.totalorder %s10, 3
    %p91 = por %p89, %p90
    %p92 = scmp.ne.s32.totalorder %s84, %s87
    %p93 = scmp.eq.s32.totalorder %s10, 0
    %p94 = por %p92, %p93
    %p95 = scmp.ne.s32.totalorder %s84, %s87
    %p96 = scmp.eq.s32.totalorder %s15, 3
    %p97 = por %p95, %p96
    %p98 = scmp.ne.s32.totalorder %s87, %s88
    %p99 = scmp.eq.s32.totalorder %s15, 0
    %p100 = por %p98, %p99
    %p101 = scmp.ne.s32.totalorder %s87, %s88
    %p102 = scmp.eq.s32.totalorder %s16, 3
    %p103 = por %p101, %p102
    %p105 = scmp.ne.s32.totalorder %s88, %s104
    %p106 = scmp.eq.s32.totalorder %s16, 0
    %p107 = por %p105, %p106
    %s108 = ssub.s32 %s17, %s29
    %p109 = scmp.eq.s32.totalorder %s108, 0
    %s111 = sadd.s32 %s110, 1
    %s112 = scalar_select %p109, %s110, %s111
    %p115 = pneg %p109
    %p116 = scmp.eq.s32.totalorder %s10, 3
    %p117 = por %p115, %p116
    %p118 = scmp.ne.s32.totalorder %s110, %s113
    %p119 = scmp.eq.s32.totalorder %s10, 0
    %p120 = por %p118, %p119
    %p121 = scmp.ne.s32.totalorder %s110, %s113
    %p122 = scmp.eq.s32.totalorder %s15, 3
    %p123 = por %p121, %p122
    %p124 = scmp.ne.s32.totalorder %s113, %s114
    %p125 = scmp.eq.s32.totalorder %s15, 0
    %p126 = por %p124, %p125
    %p127 = scmp.ne.s32.totalorder %s113, %s114
    %p128 = scmp.eq.s32.totalorder %s16, 3
    %p129 = por %p127, %p128
    %p131 = scmp.ne.s32.totalorder %s114, %s130
    %p132 = scmp.eq.s32.totalorder %s16, 0
    %p133 = por %p131, %p132
    %s134 = ssub.s32 %s18, %s25
    %s135 = ssub.s32 %s17, %s29
    %s136 = sor.u32 %s134, %s135
    %p137 = scmp.eq.s32.totalorder %s136, 0
    %s139 = sadd.s32 %s138, 1
    %s140 = scalar_select %p137, %s138, %s139
    %p143 = pneg %p137
    %p144 = scmp.eq.s32.totalorder %s10, 3
    %p145 = por %p143, %p144
    %p146 = scmp.ne.s32.totalorder %s138, %s141
    %p147 = scmp.eq.s32.totalorder %s10, 0
    %p148 = por %p146, %p147
    %p149 = scmp.ne.s32.totalorder %s138, %s141
    %p150 = scmp.eq.s32.totalorder %s15, 3
    %p151 = por %p149, %p150
    %p152 = scmp.ne.s32.totalorder %s141, %s142
    %p153 = scmp.eq.s32.totalorder %s15, 0
    %p154 = por %p152, %p153
    %p155 = scmp.ne.s32.totalorder %s141, %s142
    %p156 = scmp.eq.s32.totalorder %s16, 3
    %p157 = por %p155, %p156
    %p159 = scmp.ne.s32.totalorder %s142, %s158
    %p160 = scmp.eq.s32.totalorder %s16, 0
    %p161 = por %p159, %p160
    %p162 = scmp.le.s32.totalorder 1, %s10
    %p163 = scmp.lt.s32.totalorder %s10, 5
    %p164 = pnand %p162, %p163
    %p165 = pneg %p164
    // Predicated region
    $region9: #{factor_fno2d_block.2} parent=5 // pred_check
      _
    $region10: #{factor_fno2d_block.2} parent=5 // pred_check_branch
      %167 = sbr.rel (%p164) target = $region12
    $region11: #{factor_fno2d_block.2} parent=5 // pred_region
      %s168 = ssub.s32 %s10, 1
    $region12: #{factor_fno2d_block.2} parent=5 // pred_fallthru
      _
    %p169 = scmp.lt.s32.totalorder %s10, 4
    // Predicated region
    $region13: #{factor_fno2d_block.2} parent=5 // pred_check
      %p170 = pneg %p169
    $region14: #{factor_fno2d_block.2} parent=5 // pred_check_branch
      %172 = sbr.rel (%p170) target = $region16
    $region15: #{factor_fno2d_block.2} parent=5 // pred_region
      // Predicated region
      $region17: #{factor_fno2d_block.2} parent=15 // pred_check
        %p173 = pneg %p42
      $region18: #{factor_fno2d_block.2} parent=15 // pred_check_branch
        %175 = sbr.rel (%p173) target = $region20
      $region19: #{factor_fno2d_block.2} parent=15 // pred_region
        %p176 = scmp.lt.s32.totalorder %s18, 1
        %s177 = scalar_select %p176, %s18, 1
        %s178 = smul.addr %s177, 8
        %s179 = smul.addr %s178, 4
        %s180 = scalar_lea.vmem %s0, %s179
      $region20: #{factor_fno2d_block.2} parent=15 // pred_fallthru
        _
      // Predicated region
      $region21: #{factor_fno2d_block.2} parent=15 // pred_check
        %p181 = pneg %p68
      $region22: #{factor_fno2d_block.2} parent=15 // pred_check_branch
        %183 = sbr.rel (%p181) target = $region24
      $region23: #{factor_fno2d_block.2} parent=15 // pred_region
        %p184 = scmp.lt.s32.totalorder %s18, 1
        %s185 = scalar_select %p184, %s18, 1
        %s186 = smul.addr %s185, 2
        %s187 = smul.addr %s186, 4
        %s188 = scalar_lea.vmem %s1, %s187
      $region24: #{factor_fno2d_block.2} parent=15 // pred_fallthru
        _
      // Predicated region
      $region25: #{factor_fno2d_block.2} parent=15 // pred_check
        %p189 = pneg %p94
      $region26: #{factor_fno2d_block.2} parent=15 // pred_check_branch
        %191 = sbr.rel (%p189) target = $region28
      $region27: #{factor_fno2d_block.2} parent=15 // pred_region
        %s192 = smul.u32 4, %s17
        %p193 = scmp.lt.s32.totalorder %s192, 7
        %s194 = scalar_select %p193, %s192, 7
        %s195 = smul.addr %s194, 4
        %s196 = scalar_lea.vmem %s2, %s195
        %s197 = smul.u32 4, %s17
      $region28: #{factor_fno2d_block.2} parent=15 // pred_fallthru
        _
      // Predicated region
      $region29: #{factor_fno2d_block.2} parent=15 // pred_check
        %p198 = pneg %p120
      $region30: #{factor_fno2d_block.2} parent=15 // pred_check_branch
        %200 = sbr.rel (%p198) target = $region32
      $region31: #{factor_fno2d_block.2} parent=15 // pred_region
        %s201 = smul.u32 2, %s17
        %p202 = scmp.lt.s32.totalorder %s201, 3
        %s203 = scalar_select %p202, %s201, 3
        %s204 = smul.addr %s203, 8
        %s205 = smul.addr %s204, 4
        %s206 = scalar_lea.vmem %s3, %s205
        %s207 = smul.u32 2, %s17
      $region32: #{factor_fno2d_block.2} parent=15 // pred_fallthru
        _
    $region16: #{factor_fno2d_block.2} parent=5 // pred_fallthru
      _
    %p208 = scmp.le.s32.totalorder 1, %s10
    %p209 = scmp.lt.s32.totalorder %s10, 5
    %p210 = pnand %p208, %p209
    %p211 = pneg %p210
    // Predicated region
    $region33: #{factor_fno2d_block.2} parent=5 // pred_check
      _
    $region34: #{factor_fno2d_block.2} parent=5 // pred_check_branch
      %213 = sbr.rel (%p210) target = $region36
    $region35: #{factor_fno2d_block.2} parent=5 // pred_region
      %s214 = ssub.s32 %s10, 1
      %p215 = scmp.lt.s32.totalorder %s20, 1
      %s216 = scalar_select %p215, %s20, 1
      %s217 = smul.addr %s216, 8
      %s218 = smul.addr %s217, 4
      %s219 = scalar_lea.vmem %s0, %s218
      %p220 = pneg %p48
      %p221 = pneg %p45
      %p222 = scmp.lt.s32.totalorder %s20, 1
      %s223 = scalar_select %p222, %s20, 1
      %s224 = smul.addr %s223, 2
      %s225 = smul.addr %s224, 4
      %s226 = scalar_lea.vmem %s1, %s225
      %p227 = pneg %p74
      %p228 = pneg %p71
      %s229 = smul.u32 4, %s19
      %p230 = scmp.lt.s32.totalorder %s229, 7
      %s231 = scalar_select %p230, %s229, 7
      %s232 = smul.addr %s231, 4
      %s233 = scalar_lea.vmem %s2, %s232
      %p234 = pneg %p100
      %p235 = pneg %p97
      %s236 = smul.u32 2, %s19
      %p237 = scmp.lt.s32.totalorder %s236, 3
      %s238 = scalar_select %p237, %s236, 3
      %s239 = smul.addr %s238, 8
      %s240 = smul.addr %s239, 4
      %s241 = scalar_lea.vmem %s3, %s240
      %p242 = pneg %p126
      %p243 = pneg %p123
      %p244 = pneg %p154
      %p245 = pneg %p151
      %s246 = smul.u32 4, %s19
      %p247 = scmp.lt.s32.totalorder %s20, 1
      %s248 = scalar_select %p247, %s20, 1
      %p249 = scmp.lt.s32.totalorder %s246, 7
      %s250 = scalar_select %p249, %s246, 7
      %s251 = smul.addr %s248, 8
      %s252 = sadd.s32 %s250, %s251
      %s253 = smul.addr %s252, 8
      %s254 = scalar_lea.vmem %s4, %s253
      %p255 = scmp.lt.s32.totalorder %s20, 1
      %s256 = scalar_select %p255, %s20, 1
      %s257 = smul.addr %s256, 8
      %s258 = smul.addr %s257, 4
      %s259 = scalar_lea.vmem %s0, %s258
      %p260 = scmp.lt.s32.totalorder %s20, 1
      %s261 = scalar_select %p260, %s20, 1
      %s262 = smul.addr %s261, 2
      %s263 = smul.addr %s262, 4
      %s264 = scalar_lea.vmem %s1, %s263
      %s265 = smul.u32 4, %s19
      %p266 = scmp.lt.s32.totalorder %s265, 7
      %s267 = scalar_select %p266, %s265, 7
      %s268 = smul.addr %s267, 4
      %s269 = scalar_lea.vmem %s2, %s268
      %s270 = smul.u32 4, %s19
      %s271 = smul.u32 2, %s19
      %p272 = scmp.lt.s32.totalorder %s271, 3
      %s273 = scalar_select %p272, %s271, 3
      %s274 = smul.addr %s273, 8
      %s275 = smul.addr %s274, 4
      %s276 = scalar_lea.vmem %s3, %s275
      %s277 = smul.u32 2, %s19
      %s278 = smul.u32 4, %s19
      %p279 = scmp.lt.s32.totalorder %s20, 1
      %s280 = scalar_select %p279, %s20, 1
      %p281 = scmp.lt.s32.totalorder %s278, 7
      %s282 = scalar_select %p281, %s278, 7
      %s283 = smul.addr %s280, 8
      %s284 = sadd.s32 %s282, %s283
      %s285 = smul.addr %s284, 8
      %s286 = scalar_lea.vmem %s4, %s285
      %s287 = smul.u32 4, %s19
      %v289 = vld [vmem:[%s259] sm:$0xf]
      %v290 = vld [vmem:[%s259 + $0x4] sm:$0xf]
      %v291 = vld [vmem:[%s259 + $0x8] sm:$0xf]
      %v292 = vld [vmem:[%s259 + $0xc] sm:$0xf]
      %v293 = vld [vmem:[%s259 + $0x10] sm:$0xf]
      %v294 = vld [vmem:[%s259 + $0x14] sm:$0xf]
      %v295 = vld [vmem:[%s259 + $0x18] sm:$0xf]
      %v296 = vld [vmem:[%s259 + $0x1c] sm:$0xf]
      %v297 = vld [vmem:[%s264] sm:$0xf]
      %v298 = vld [vmem:[%s264 + $0x4] sm:$0xf]
      %v299 = vld [vmem:[%s269] sm:$0xf]
      %v300 = vld [vmem:[%s269 + $0x4] sm:$0xf]
      %v301 = vld [vmem:[%s269 + $0x8] sm:$0xf]
      %v302 = vld [vmem:[%s269 + $0xc] sm:$0xf]
      %v307 = vunpack.c.l.b16 %v299
      %v308 = vunpack.c.l.b16 %v300
      %v309 = vunpack.c.l.b16 %v301
      %v310 = vunpack.c.l.b16 %v302
      %v311 = vpack.c.b16 %v308, %v307
      %v312 = vpack.c.b16 %v310, %v309
      %v321 = vunpack.c.l.b16 %v289
      %v322 = vunpack.c.l.b16 %v290
      %v323 = vunpack.c.l.b16 %v291
      %v324 = vunpack.c.l.b16 %v292
      %v325 = vunpack.c.l.b16 %v293
      %v326 = vunpack.c.l.b16 %v294
      %v327 = vunpack.c.l.b16 %v295
      %v328 = vunpack.c.l.b16 %v296
      %v329 = vpack.c.b16 %v322, %v321
      %v330 = vpack.c.b16 %v324, %v323
      %v331 = vpack.c.b16 %v326, %v325
      %v332 = vpack.c.b16 %v328, %v327
      %vm337 = vcmask 523264
      %v339 = vsel %vm337, %v311, 0
      %v342 = vsel %vm337, %v312, 0
      %344 = vmatpush.bf16.msra.mxu0 0
      %345 = vmatpush.bf16.msra.mxu0 0
      %346 = vmatpush.bf16.msra.mxu0 0
      %347 = vmatpush.bf16.msra.mxu0 0
      %348 = vmatpush.bf16.msra.mxu0 %v332
      %349 = vmatpush.bf16.msra.mxu0 %v331
      %350 = vmatpush.bf16.msra.mxu0 %v330
      %351 = vmatpush.bf16.msra.mxu0 %v329
      %352 = vmatmul.bf16.gmra.mxu0 %v339
      %v353 = vpop.f32.mrf.mxu0
      %v354 = vadd.f32 0.0, %v353
      %v355 = vpop.f32.mrf.mxu0
      %v356 = vadd.f32 0.0, %v355
      %357 = vmatmul.bf16.gmra.mxu0 %v342
      %v358 = vpop.f32.mrf.mxu0
      %v359 = vadd.f32 0.0, %v358
      %v360 = vpop.f32.mrf.mxu0
      %v361 = vadd.f32 0.0, %v360
      %362 = vdwg.mxu0
      %v363 = vld [vmem:[%s276] sm:$0xf]
      %v364 = vld [vmem:[%s276 + $0x4] sm:$0xf]
      %v365 = vld [vmem:[%s276 + $0x8] sm:$0xf]
      %v366 = vld [vmem:[%s276 + $0xc] sm:$0xf]
      %v367 = vld [vmem:[%s276 + $0x10] sm:$0xf]
      %v368 = vld [vmem:[%s276 + $0x14] sm:$0xf]
      %v369 = vld [vmem:[%s276 + $0x18] sm:$0xf]
      %v370 = vld [vmem:[%s276 + $0x1c] sm:$0xf]
      %v373 = vunpack.c.l.b16 %v297
      %v374 = vunpack.c.l.b16 %v298
      %v375 = vpack.c.b16 %v374, %v373
      %v384 = vunpack.c.l.b16 %v363
      %v385 = vunpack.c.l.b16 %v364
      %v386 = vunpack.c.l.b16 %v365
      %v387 = vunpack.c.l.b16 %v366
      %v388 = vunpack.c.l.b16 %v367
      %v389 = vunpack.c.l.b16 %v368
      %v390 = vunpack.c.l.b16 %v369
      %v391 = vunpack.c.l.b16 %v370
      %v392 = vpack.c.b16 %v385, %v384
      %v393 = vpack.c.b16 %v387, %v386
      %v394 = vpack.c.b16 %v389, %v388
      %v395 = vpack.c.b16 %v391, %v390
      %v401 = vsel %vm337, %v375, 0
      %403 = vmatpush.bf16.msra.mxu0 0
      %404 = vmatpush.bf16.msra.mxu0 0
      %405 = vmatpush.bf16.msra.mxu0 0
      %406 = vmatpush.bf16.msra.mxu0 0
      %407 = vmatpush.bf16.msra.mxu0 %v395
      %408 = vmatpush.bf16.msra.mxu0 %v394
      %409 = vmatpush.bf16.msra.mxu0 %v393
      %410 = vmatpush.bf16.msra.mxu0 %v392
      %411 = vmatmul.bf16.gmra.mxu0 %v401
      %v412 = vpop.f32.mrf.mxu0
      %v413 = vadd.f32 0.0, %v412
      %v414 = vpop.f32.mrf.mxu0
      %v415 = vadd.f32 0.0, %v414
      %416 = vdwg.mxu0
      %v417 = vadd.f32 %v354, %v413
      %v418 = vadd.f32 %v356, %v415
      %vm419 = vcmask 130048
      %420 = vst.msk [vmem:[%s286] sm:$0xff] %vm419, %v417
      %421 = vst.msk [vmem:[%s286 + $0x8] sm:$0xff] %vm419, %v418
      %s422 = scalar_lea.vmem %s276, 32
      %v423 = vld [vmem:[%s422] sm:$0xf]
      %v424 = vld [vmem:[%s422 + $0x4] sm:$0xf]
      %v425 = vld [vmem:[%s422 + $0x8] sm:$0xf]
      %v426 = vld [vmem:[%s422 + $0xc] sm:$0xf]
      %v427 = vld [vmem:[%s422 + $0x10] sm:$0xf]
      %v428 = vld [vmem:[%s422 + $0x14] sm:$0xf]
      %v429 = vld [vmem:[%s422 + $0x18] sm:$0xf]
      %v430 = vld [vmem:[%s422 + $0x1c] sm:$0xf]
      %v439 = vunpack.c.l.b16 %v423
      %v440 = vunpack.c.l.b16 %v424
      %v441 = vunpack.c.l.b16 %v425
      %v442 = vunpack.c.l.b16 %v426
      %v443 = vunpack.c.l.b16 %v427
      %v444 = vunpack.c.l.b16 %v428
      %v445 = vunpack.c.l.b16 %v429
      %v446 = vunpack.c.l.b16 %v430
      %v447 = vpack.c.b16 %v440, %v439
      %v448 = vpack.c.b16 %v442, %v441
      %v449 = vpack.c.b16 %v444, %v443
      %v450 = vpack.c.b16 %v446, %v445
      %455 = vmatpush.bf16.msra.mxu0 0
      %456 = vmatpush.bf16.msra.mxu0 0
      %457 = vmatpush.bf16.msra.mxu0 0
      %458 = vmatpush.bf16.msra.mxu0 0
      %459 = vmatpush.bf16.msra.mxu0 %v450
      %460 = vmatpush.bf16.msra.mxu0 %v449
      %461 = vmatpush.bf16.msra.mxu0 %v448
      %462 = vmatpush.bf16.msra.mxu0 %v447
      %463 = vmatmul.bf16.gmra.mxu0 %v401
      %v464 = vpop.f32.mrf.mxu0
      %v465 = vadd.f32 0.0, %v464
      %v466 = vpop.f32.mrf.mxu0
      %v467 = vadd.f32 0.0, %v466
      %468 = vdwg.mxu0
      %v469 = vadd.f32 %v359, %v465
      %v470 = vadd.f32 %v361, %v467
      %471 = vst.msk [vmem:[%s286 + $0x10] sm:$0xff] %vm419, %v469
      %472 = vst.msk [vmem:[%s286 + $0x18] sm:$0xff] %vm419, %v470
      %s473 = smul.u32 4, %s19
      %p474 = scmp.lt.s32.totalorder %s20, 1
      %s475 = scalar_select %p474, %s20, 1
      %p476 = scmp.lt.s32.totalorder %s473, 7
      %s477 = scalar_select %p476, %s473, 7
      %s478 = smul.addr %s475, 8
      %s479 = sadd.s32 %s477, %s478
      %s480 = smul.addr %s479, 8
      %s481 = scalar_lea.vmem %s4, %s480
      // Predicated region
      $region37: #{factor_fno2d_block.2} parent=35 // pred_check
        %p482 = pneg %p151
      $region38: #{factor_fno2d_block.2} parent=35 // pred_check_branch
        %484 = sbr.rel (%p482) target = $region40
      $region39: #{factor_fno2d_block.2} parent=35 // pred_region
        %s485 = smul.u32 4, %s19
      $region40: #{factor_fno2d_block.2} parent=35 // pred_fallthru
        _
    $region36: #{factor_fno2d_block.2} parent=5 // pred_fallthru
      _
    %p486 = scmp.le.s32.totalorder 2, %s10
    // Predicated region
    $region41: #{factor_fno2d_block.2} parent=5 // pred_check
      %p487 = pneg %p486
    $region42: #{factor_fno2d_block.2} parent=5 // pred_check_branch
      %489 = sbr.rel (%p487) target = $region44
    $region43: #{factor_fno2d_block.2} parent=5 // pred_region
      %s490 = ssub.s32 %s10, 2
      // Predicated region
      $region45: #{factor_fno2d_block.2} parent=43 // pred_check
        %p491 = pneg %p157
      $region46: #{factor_fno2d_block.2} parent=43 // pred_check_branch
        %493 = sbr.rel (%p491) target = $region48
      $region47: #{factor_fno2d_block.2} parent=43 // pred_region
        %s494 = smul.u32 4, %s21
        %p495 = scmp.lt.s32.totalorder %s22, 1
        %s496 = scalar_select %p495, %s22, 1
        %p497 = scmp.lt.s32.totalorder %s494, 7
        %s498 = scalar_select %p497, %s494, 7
        %s499 = smul.addr %s496, 8
        %s500 = sadd.s32 %s498, %s499
        %s501 = smul.addr %s500, 8
        %s502 = scalar_lea.vmem %s4, %s501
      $region48: #{factor_fno2d_block.2} parent=43 // pred_fallthru
        _
    $region44: #{factor_fno2d_block.2} parent=5 // pred_fallthru
      _
  $region6: #{factor_fno2d_block.2} parent=0 // loop_footer
    %s14 = sadd.s32 1, %s10
  $region7: #{factor_fno2d_block.2} parent=0 // loop_footer_branch
    %9 = sbr.rel target = $region3
  $region8: #{factor_fno2d_block.2} parent=0 // loop_exit
    _

</llo_original>
